<compile_context>
chip_gen: v5e
topology: v5e:2x2
jax: 0.10.0
libtpu: 0.0.40
codegen_flags: <defaults>
</compile_context>

<pallas_src>
import math
import functools

import jax
import jax.numpy as jnp
from jax.experimental import pallas as pl
from jax.experimental.pallas import tpu as pltpu


# ----------------------------- tile / budget selection --------------------- #

_PAYLOAD_TARGET = 4 * 1024 * 1024   # per-tile embeds bytes beyond which per-step overhead <~1%


def _input_budget_bytes():
    """Budget for the double-buffered (tm, D) embeds tile, per TPU generation."""
    try:
        kind = jax.devices()[0].device_kind.lower()
    except Exception:  # pragma: no cover - defensive
        kind = ""
    if ("v6" in kind) or ("v7" in kind):
        # v6e (32 MiB scoped default of 128 MiB) / v7x (32 of 64): big tiles amortize the
        # ~0.35 us per-grid-step overhead; vmem_limit_bytes is raised to match below.
        return 20 * 1024 * 1024
    # v5e / unknown: stay well under the 16 MiB default scoped VMEM.
    return 10 * 1024 * 1024


def _pick_tile(M, D, itemsize, budget):
    """Row tile: largest 128-multiple whose double-buffered (tm, D) tile fits `budget`,
    capped by a ~4 MiB payload target, never padded (grid = cdiv(M, tm)), and split so the
    grid has >=2 steps (v7x megacore) whenever M allows it."""
    if M <= 128:
        return M                                    # single partial tile; block dim == full dim
    row_bytes = D * itemsize
    cap = budget // (2 * row_bytes)                 # rows allowed by the double-buffer budget
    cap = min(cap, max(2048, _PAYLOAD_TARGET // max(row_bytes, 1)))
    tm = max(128, (cap // 128) * 128)
    m128 = ((M + 127) // 128) * 128
    tm = min(tm, m128)
    if tm >= M:
        # would be a single grid step: split so dimension_semantics=("parallel",) can use
        # both TensorCores on v7x (and so partial-block masking is exercised consistently).
        half = ((((M + 1) // 2) + 127) // 128) * 128
        tm = max(128, half)
    return tm


def _vmem_limit_bytes(tm, D, e_itemsize):
    """Explicit scoped-VMEM limit matching the real footprint (+ margin), so large-D cases
    that would exceed the default scoped limit still compile."""
    e_bytes = 2 * tm * D * e_itemsize                   # double-buffered embeds tile
    w_bytes = 2 * 8 * D * 4                             # (1, D) weight row (sublane-padded) x2
    col_bytes = 2 * ((tm + 7) // 8) * 8 * 128 * 4       # one (tm, 1) column block (logits or labels) x2
    part_bytes = 2 * 8 * 128 * 4                        # loss partial block x2
    need = e_bytes + w_bytes + col_bytes + part_bytes + (4 << 20)
    return int(max(need, 32 << 20))


# ----------------------------- Pallas kernels ------------------------------ #

def _to_pred_kernel(e_ref, w_ref, b_ref, o_ref):
    # z[m] = sum_d e[m, d] * w[0, d] + b     (VPU multiply + lane reduce; MXU would be
    # weight-load bound with a 1-wide operand)
    e = e_ref[...].astype(jnp.float32)                       # (tm, D)
    w = w_ref[...].astype(jnp.float32)                       # (1, D)
    z = jnp.sum(e * w, axis=-1, keepdims=True) + b_ref[0]    # (tm, 1)
    # Partial last block: Pallas masks the out-of-bounds rows on writeback, so garbage z
    # from the unfilled tail of the e tile never reaches HBM.
    o_ref[...] = z.astype(o_ref.dtype)


def _critic_loss_kernel(e_ref, w_ref, b_ref, y_ref, part_ref, *, tm, valid_m):
    i = pl.program_id(0)
    e = e_ref[...].astype(jnp.float32)                       # (tm, D)
    w = w_ref[...].astype(jnp.float32)                       # (1, D)
    z = jnp.sum(e * w, axis=-1, keepdims=True) + b_ref[0]    # (tm, 1)
    y = y_ref[...].astype(jnp.float32)                       # (tm, 1)
    # numerically-stable BCE-with-logits per element: max(z,0) - z*y + log1p(exp(-|z|))
    per = jnp.maximum(z, 0.0) - z * y + jnp.log1p(jnp.exp(-jnp.abs(z)))
    # mask rows of the partial last block (they contain garbage/stale VMEM, not zeros)
    rows = jax.lax.broadcasted_iota(jnp.int32, (tm, 1), 0) + i * tm
    per = jnp.where(rows < valid_m, per, 0.0)
    # one lane-dense partial block per tile (tile sum splat across all 1024 slots);
    # combined outside as sum(partials) / (1024 * valid_m)
    part_ref[...] = jnp.zeros((1, 8, 128), jnp.float32) + jnp.sum(per)


# ----------------------------- pallas_call wrappers ------------------------ #

@functools.partial(jax.jit, static_argnames=("tm",))
def to_pred_pallas(e2d, w_row, b1, *, tm):
    M, D = e2d.shape
    grid = pl.cdiv(M, tm)
    return pl.pallas_call(
        _to_pred_kernel,
        out_shape=jax.ShapeDtypeStruct((M, 1), jnp.float32),
        grid_spec=pltpu.PrefetchScalarGridSpec(
            num_scalar_prefetch=0,
            grid=(grid,),
            in_specs=[
                pl.BlockSpec((tm, D), lambda i: (i, 0)),
                pl.BlockSpec((1, D), lambda i: (0, 0)),
                pl.BlockSpec(memory_space=pltpu.MemorySpace.SMEM),
            ],
            out_specs=pl.BlockSpec((tm, 1), lambda i: (i, 0)),
        ),
        compiler_params=pltpu.CompilerParams(
            dimension_semantics=("parallel",),
            vmem_limit_bytes=_vmem_limit_bytes(tm, D, e2d.dtype.itemsize),
        ),
    )(e2d, w_row, b1)


@functools.partial(jax.jit, static_argnames=("tm", "valid_m"))
def critic_loss_pallas(e2d, w_row, b1, y2d, *, tm, valid_m):
    M, D = e2d.shape
    g = pl.cdiv(M, tm)
    kernel = functools.partial(_critic_loss_kernel, tm=tm, valid_m=valid_m)
    partials = pl.pallas_call(
        kernel,
        out_shape=jax.ShapeDtypeStruct((g, 8, 128), jnp.float32),
        grid_spec=pltpu.PrefetchScalarGridSpec(
            num_scalar_prefetch=0,
            grid=(g,),
            in_specs=[
                pl.BlockSpec((tm, D), lambda i: (i, 0)),
                pl.BlockSpec((1, D), lambda i: (0, 0)),
                pl.BlockSpec(memory_space=pltpu.MemorySpace.SMEM),
                pl.BlockSpec((tm, 1), lambda i: (i, 0)),
            ],
            out_specs=pl.BlockSpec((1, 8, 128), lambda i: (i, 0, 0)),
        ),
        compiler_params=pltpu.CompilerParams(
            dimension_semantics=("parallel",),
            vmem_limit_bytes=_vmem_limit_bytes(tm, D, e2d.dtype.itemsize),
        ),
    )(e2d, w_row, b1, y2d)
    # each tile's block holds 1024 copies of its sum -> divide by 1024*M (mean reduction)
    return jnp.sum(partials) / (1024.0 * jnp.float32(valid_m))


# ----------------------------- SelfCritic module --------------------------- #

class SelfCriticPallas:
    """JAX/Pallas port of SelfCritic: to_pred = nn.Linear(net.dim, 1)."""

    def __init__(self, dim, vocab_size, key):
        self.dim = dim
        k_emb, k_w, k_b = jax.random.split(key, 3)
        # TODO(synk): the real `net` is an external MaskGit transformer; replaced by a
        #             deterministic embedding lookup producing `embeds` of shape (B, N, dim).
        # Embeds are produced in bf16 (halves the HBM read the kernel is bound by).
        self.embed_table = (0.02 * jax.random.normal(k_emb, (vocab_size, dim), jnp.float32)
                            ).astype(jnp.bfloat16)
        # nn.Linear(dim, 1) init (uniform(-1/sqrt(dim), 1/sqrt(dim)))
        bound = 1.0 / math.sqrt(dim)
        self.w = jax.random.uniform(k_w, (1, dim), jnp.float32, -bound, bound)   # Linear.weight (1, D)
        self.b = jax.random.uniform(k_b, (1,), jnp.float32, -bound, bound)       # Linear.bias  (1,)
        self._budget = _input_budget_bytes()

    def _net_embeds(self, x):
        # (B, N) int tokens -> (B, N, dim) bf16 embeds  (plain-JAX glue, not the hot path)
        return jnp.take(self.embed_table, x, axis=0)

    def forward(self, x, labels=None):
        embeds = self._net_embeds(x)                     # (B, N, D)
        B, N, D = embeds.shape
        M = B * N
        e2d = embeds.reshape(M, D)                       # leading-dim fold: free, no HBM copy
        tm = _pick_tile(M, D, e2d.dtype.itemsize, self._budget)

        if labels is None:
            logits = to_pred_pallas(e2d, self.w, self.b, tm=tm)   # (M, 1) f32, no padding
            return logits.reshape(B, N, 1)

        # TODO(synk): the 'b (cam h w) -> (b cam) (h w)' rearrange branch needs net.cfg;
        #             here logits.shape[0] == labels.shape[0], so it is a no-op flatten.
        y2d = labels.reshape(M, 1).astype(jnp.float32)
        return critic_loss_pallas(e2d, self.w, self.b, y2d, tm=tm, valid_m=M)


# ----------------------------- reference (plain JAX) ----------------------- #

def _ref_forward(model, x, labels=None):
    embeds = model._net_embeds(x).astype(jnp.float32)
    logits = jnp.einsum("bnd,od->bno", embeds, model.w,
                        precision="highest") + model.b          # (B, N, 1)
    if labels is None:
        return logits
    z = logits[..., 0]
    y = labels.astype(jnp.float32)
    per = jnp.maximum(z, 0.0) - z * y + jnp.log1p(jnp.exp(-jnp.abs(z)))
    return jnp.mean(per)


# ----------------------------- main ---------------------------------------- #

if __name__ == "__main__":
    key = jax.random.PRNGKey(0)
    k_model, k_x, k_y, k_e, k_l = jax.random.split(key, 5)

    B, N, D, V = 2, 8, 32, 64
    model = SelfCriticPallas(dim=D, vocab_size=V, key=k_model)

    x = jax.random.randint(k_x, (B, N), 0, V, dtype=jnp.int32)            # token ids
    labels = jax.random.bernoulli(k_y, 0.5, (B, N)).astype(jnp.float32)   # {0, 1} targets

    # forward without labels -> logits (B, N, 1)
    logits = jax.block_until_ready(model.forward(x))
    # forward with labels -> scalar BCE-with-logits loss
    loss = jax.block_until_ready(model.forward(x, labels=labels))

    # sanity check vs plain-JAX reference
    ref_logits = _ref_forward(model, x)
    ref_loss = _ref_forward(model, x, labels)
    assert logits.shape == (B, N, 1)
    assert jnp.allclose(logits, ref_logits, atol=1e-5, rtol=1e-5)
    assert jnp.allclose(loss, ref_loss, atol=1e-5, rtol=1e-5)
    assert jnp.isfinite(loss)

    # extra check: multi-tile grid with a PARTIAL last block (no wrapper padding),
    # "parallel" per-tile partial sums, and in-kernel row masking.
    Mb = 300                                                     # 300 % 128 != 0 -> grid=3, partial tail
    e_big = (0.02 * jax.random.normal(k_e, (Mb, D), jnp.float32)).astype(jnp.bfloat16)
    y_big = jax.random.bernoulli(k_l, 0.5, (Mb,)).astype(jnp.float32)
    logits_big = to_pred_pallas(e_big, model.w, model.b, tm=128)
    loss_big = critic_loss_pallas(e_big, model.w, model.b, y_big.reshape(Mb, 1),
                                  tm=128, valid_m=Mb)
    jax.block_until_ready((logits_big, loss_big))
    ef = e_big.astype(jnp.float32)
    z_ref = jnp.dot(ef, model.w[0], precision="highest") + model.b[0]     # (300,)
    per_ref = jnp.maximum(z_ref, 0.0) - z_ref * y_big + jnp.log1p(jnp.exp(-jnp.abs(z_ref)))
    assert logits_big.shape == (Mb, 1)
    assert jnp.allclose(logits_big[:, 0], z_ref, atol=1e-5, rtol=1e-5)
    assert jnp.allclose(loss_big, jnp.mean(per_ref), atol=1e-5, rtol=1e-5)

    print("KERNEL_OK")
</pallas_src>

<mosaic_0001>
module attributes {stable_mosaic.version = 11 : i64} {
  func.func @_to_pred_kernel(%arg0: i32, %arg1: memref<16x32xbf16, #tpu.memory_space<vmem>>, %arg2: memref<1x32xf32, #tpu.memory_space<vmem>>, %arg3: memref<1xf32, #tpu.memory_space<smem>>, %arg4: memref<16x1xf32, #tpu.memory_space<vmem>>) attributes {dimension_semantics = [#tpu.dimension_semantics<parallel>], iteration_bounds = array<i64: 1>, scalar_prefetch = 0 : i64, scratch_operands = 0 : i64, tpu.core_type = #tpu.core_type<tc>, window_params = [{transform_indices = @transform_0, window_bounds = array<i64: 16, 32>}, {pipeline_mode = #tpu.pipeline_mode<synchronous>, transform_indices = @transform_1, window_bounds = array<i64: 1, 32>}, {transform_indices = @transform_2, window_bounds = array<i64: 1>}, {transform_indices = @transform_3, window_bounds = array<i64: 16, 1>}]} {
    %c0 = arith.constant 0 : index
    %c0_0 = arith.constant 0 : index
    %0 = vector.load %arg1[%c0, %c0_0] : memref<16x32xbf16, #tpu.memory_space<vmem>>, vector<16x32xbf16>
    %1 = arith.extf %0 : vector<16x32xbf16> to vector<16x32xf32>
    %c0_1 = arith.constant 0 : index
    %c0_2 = arith.constant 0 : index
    %2 = vector.load %arg2[%c0_1, %c0_2] : memref<1x32xf32, #tpu.memory_space<vmem>>, vector<1x32xf32>
    %3 = vector.broadcast %2 : vector<1x32xf32> to vector<16x32xf32>
    %4 = arith.mulf %1, %3 : vector<16x32xf32>
    %cst = arith.constant dense<0.000000e+00> : vector<16xf32>
    %5 = vector.multi_reduction <add>, %4, %cst [1] : vector<16x32xf32> to vector<16xf32>
    %6 = vector.shape_cast %5 : vector<16xf32> to vector<16x1xf32>
    %c0_3 = arith.constant 0 : index
    %7 = memref.load %arg3[%c0_3] : memref<1xf32, #tpu.memory_space<smem>>
    %8 = vector.broadcast %7 : f32 to vector<16x1xf32>
    %9 = arith.addf %6, %8 : vector<16x1xf32>
    %c0_4 = arith.constant 0 : index
    %c0_5 = arith.constant 0 : index
    %10 = vector.load %arg4[%c0_4, %c0_5] : memref<16x1xf32, #tpu.memory_space<vmem>>, vector<16x1xf32>
    tpu.vector_store %arg4[%c0_4, %c0_5], %9 {strides = array<i32>} : memref<16x1xf32, #tpu.memory_space<vmem>>, vector<16x1xf32>,
    return
  }
  func.func @transform_0(%arg0: i32) -> (i32, i32) {
    %c0_i32 = arith.constant 0 : i32
    %c0_i32_0 = arith.constant 0 : i32
    return %arg0, %c0_i32 : i32, i32
  }
  func.func @transform_1(%arg0: i32) -> (i32, i32) {
    %c0_i32 = arith.constant 0 : i32
    %c0_i32_0 = arith.constant 0 : i32
    %c0_i32_1 = arith.constant 0 : i32
    return %c0_i32, %c0_i32_0 : i32, i32
  }
  func.func @transform_2(%arg0: i32) -> i32 {
    %c0_i32 = arith.constant 0 : i32
    %c0_i32_0 = arith.constant 0 : i32
    return %c0_i32 : i32
  }
  func.func @transform_3(%arg0: i32) -> (i32, i32) {
    %c0_i32 = arith.constant 0 : i32
    %c0_i32_0 = arith.constant 0 : i32
    return %arg0, %c0_i32 : i32, i32
  }
}

</mosaic_0001>

<llo_original>
// kernel: to_pred_pallas.1
$region0: #{to_pred_pallas.1}
  #allocation0 [shape = 'u32[]', space=smem, size = 0x4, offset = 0x4, fixed_abs, tag = 'smem constant byte address 0x4 - core index']
  #allocation1 [shape = 'u32[72,128]{1,0:T(1,128)}', space=vmem, size = 0x9000, scoped, tag = 'internal scratch']
  #allocation2 [shape = 'f32[1]{0:T(128)S(6)}', space=smem, size = 0x200, scoped, tag = 'scoped memory for to_pred_pallas.1']
  %s0 = inlined_call_operand.hbm [shape: bf16[16,32], index: 0, kind: input, shape index: {}]
  %s1 = inlined_call_operand.vmem [shape: f32[1,32], index: 1, kind: input, shape index: {}]
  %s2 = inlined_call_operand.<no memory space> [shape: f32[1], index: 2, kind: input, shape index: {}]
  %s3 = inlined_call_operand.vmem [shape: f32[16,1], index: 3, kind: output, shape index: {}]
  %s4 = sld [smem:[#allocation0]]
  $region26: #{to_pred_pallas.1} parent=0
    _
  %s6 = ssub.s32 1, %s4
  %s7 = scalar_select 0, %s6, %s4
  %8 = sst [smem:[#allocation2]] %s2
  $region1: #{to_pred_pallas.1} parent=0
    #allocation3 [shape = 'u8[4096]{0}', space=vmem, size = 0x1000, scoped, tag = 'input window, operand 0, single buffered']
    #allocation4 [shape = 's32[1]{0}', space=sflag, size = 0x4, scoped, tag = 'scoped memory for to_pred_pallas.1']
    %9 = vsyncpa [#allocation4], 0
    // Predicated region
    $region2: #{to_pred_pallas.1} parent=1 // pred_check
      _
    $region3: #{to_pred_pallas.1} parent=1 // pred_check_branch
      %11 = sbr.rel (0) target = $region5
    $region4: #{to_pred_pallas.1} parent=1 // pred_region
      %13 = vsyncadd [#allocation4], 0
      %s14 = sshll.u32 %s0, 4
      %s15 = int_to_ptr.hbm [resolvable:$true] %s14
      %s16 = sshll.u32 [#allocation3], 4
      %s17 = int_to_ptr.vmem [resolvable:$true] %s16
      %22 = dma.hbm_to_vmem [thread:$0]  %s15, 128, %s17, [#allocation4], 64, 64, 4
    $region5: #{to_pred_pallas.1} parent=1 // pred_fallthru
      _
    // Predicated region
    $region6: #{to_pred_pallas.1} parent=1 // pred_check
      _
    $region7: #{to_pred_pallas.1} parent=1 // pred_check_branch
      %24 = sbr.rel (0) target = $region9
    $region8: #{to_pred_pallas.1} parent=1 // pred_region
      _
    $region9: #{to_pred_pallas.1} parent=1 // pred_fallthru
      _
    // Predicated region
    $region10: #{to_pred_pallas.1} parent=1 // pred_check
      _
    $region11: #{to_pred_pallas.1} parent=1 // pred_check_branch
      %26 = sbr.rel (0) target = $region13
    $region12: #{to_pred_pallas.1} parent=1 // pred_region
      _
    $region13: #{to_pred_pallas.1} parent=1 // pred_fallthru
      _
    // Predicated region
    $region14: #{to_pred_pallas.1} parent=1 // pred_check
      _
    $region15: #{to_pred_pallas.1} parent=1 // pred_check_branch
      %28 = sbr.rel (0) target = $region17
    $region16: #{to_pred_pallas.1} parent=1 // pred_region
      %30 = dma.done [#allocation4], 128
    $region17: #{to_pred_pallas.1} parent=1 // pred_fallthru
      _
    %v31 = vld [vmem:[#allocation3] sm:$0xf]
    %v32 = vld [vmem:[#allocation3 + $0x4] sm:$0xf]
    %v33 = vunpack.c.l.bf16 %v31
    %v34 = vunpack.c.l.bf16 %v32
    %v35 = vld [vmem:[%s1] sm:$0x1]
    %v37 = vperm.slane %v35, 0
    %v39 = vmul.f32 %v33, %v37
    %v40 = vmul.f32 %v34, %v37
    %vm41 = vcmask 261120
    %v42 = vsel %vm41, %v39, 0.0
    %43 = vadd.xlane.f32.xlu0 %v42
    %v44 = vpop.xlane.xlu0 %43
    %v45 = vsel %vm41, %v40, 0.0
    %46 = vadd.xlane.f32.xlu0 %v45
    %v47 = vpop.xlane.xlu0 %46
    %s48 = sld [smem:[#allocation2]]
    %v49 = vstv %s48
    %v50 = vadd.f32 %v44, %v49
    %v51 = vadd.f32 %v47, %v49
    %vm52 = vcmask 7168
    %53 = vst.msk [vmem:[%s3] sm:$0xff] %vm52, %v50
    %54 = vst.msk [vmem:[%s3 + $0x8] sm:$0xff] %vm52, %v51
    // Predicated region
    $region18: #{to_pred_pallas.1} parent=1 // pred_check
      _
    $region19: #{to_pred_pallas.1} parent=1 // pred_check_branch
      %56 = sbr.rel (0) target = $region21
    $region20: #{to_pred_pallas.1} parent=1 // pred_region
      _
    $region21: #{to_pred_pallas.1} parent=1 // pred_fallthru
      _
    // Predicated region
    $region22: #{to_pred_pallas.1} parent=1 // pred_check
      _
    $region23: #{to_pred_pallas.1} parent=1 // pred_check_branch
      %58 = sbr.rel (0) target = $region25
    $region24: #{to_pred_pallas.1} parent=1 // pred_region
      _
    $region25: #{to_pred_pallas.1} parent=1 // pred_fallthru
      _
    %59 = vsyncpa [#allocation4], 1

</llo_original>
